<compile_context>
chip_gen: v7x
topology: tpu7x:2x2x1
jax: 0.10.0
libtpu: 0.0.40
codegen_flags: <defaults>
</compile_context>

<pallas_src>
import functools

import jax
import jax.numpy as jnp
from jax.experimental import pallas as pl
from jax.experimental.pallas import tpu as pltpu

EPS = 1e-5
MOMENTUM = 0.1


# ------------------------------ small helpers -------------------------------
def _round_up(x, m):
    return ((x + m - 1) // m) * m


def _cdiv(a, b):
    return (a + b - 1) // b


def _vmem_capacity_bytes():
    """Per-core VMEM capacity; conservative 64 MiB (v7x) if the query is unavailable."""
    try:
        return int(pltpu.get_tpu_info().vmem_capacity_bytes)
    except Exception:
        return 64 << 20


def _choose_fused_ct(N, C, L, budget, itemsize):
    """Channel-tile for the fused path, or None if even the minimal slab won't fit VMEM."""
    ct_align = 16 if itemsize < 4 else 8          # bf16 needs (16,128) sublane tiles
    slab_f32 = N * L * 4                          # per-channel f32 working bytes
    ct_min = C if C <= ct_align else ct_align
    # resident ~= 2x in + 2x out + f32 upcast + centered temp ~= 6x slab per channel
    if 6 * ct_min * slab_f32 > budget:
        return None
    if C <= ct_align:
        return C
    ct = (budget // (6 * slab_f32)) // ct_align * ct_align
    if C >= 2 * ct_align:
        # keep >= 2 channel blocks so the "parallel" axis shards across both v7x TCs
        ct = min(ct, _round_up(_cdiv(C, 2), ct_align))
    if ct >= C:
        return C
    return max(ct_align, ct)


def _choose_two_pass_tiles(rows, L, budget, itemsize):
    """(row_tile, l_tile) for the fallback path, sized against the VMEM budget."""
    l_tile = L if L <= 8192 else 8192             # multiple of 128 when < L
    row_align = 16 if itemsize < 4 else 8
    if rows <= row_align:
        return rows, l_tile
    max_by_vmem = max(row_align, (budget // (5 * 4 * l_tile)) // row_align * row_align)
    half = _round_up(_cdiv(rows, 2), row_align)   # guarantee grid[0] >= 2 (v7x megacore)
    row_tile = max(row_align, min(512, max_by_vmem, half))
    return row_tile, l_tile


# ----------------------------- Pallas kernels -------------------------------
def _fused_bn_kernel(x_ref, wb_ref, y_ref, mv_ref, *, inv_n, eps):
    """Single HBM pass per channel slab: stats + normalize + affine.

    x_ref: (N, ct, L); wb_ref: (ct, 2) = [w | b]; y_ref: (N, ct, L); mv_ref: (ct, 2) = [mean | var].
    """
    xf = x_ref[...].astype(jnp.float32)
    # Two passes over the in-VMEM slab (mean, then centered variance): numerically robust,
    # still exactly one HBM read of x.
    mean = jnp.sum(jnp.sum(xf, axis=0), axis=-1, keepdims=True) * inv_n      # (ct, 1)
    d = xf - mean[None, :, :]
    var = jnp.sum(jnp.sum(d * d, axis=0), axis=-1, keepdims=True) * inv_n    # (ct, 1)
    inv_std = jax.lax.rsqrt(var + eps)
    w = wb_ref[:, 0:1]                                                       # (ct, 1)
    b = wb_ref[:, 1:2]
    scale = inv_std * w
    y_ref[...] = (d * scale[None, :, :] + b[None, :, :]).astype(y_ref.dtype)
    mv_ref[:, 0:1] = mean
    mv_ref[:, 1:2] = var


def _stats_kernel(x_ref, sum_ref, sq_ref, *, true_L, l_tile):
    """Fallback pass 1: per-row sum / sumsq with resident (row_tile, 1) f32 accumulators."""
    l = pl.program_id(1)

    @pl.when(l == 0)
    def _():
        sum_ref[...] = jnp.zeros_like(sum_ref)
        sq_ref[...] = jnp.zeros_like(sq_ref)

    xf = x_ref[...].astype(jnp.float32)
    if true_L % l_tile != 0:
        # cdiv grid: mask the ragged tail so padding never enters the sums.
        col = l * l_tile + jax.lax.broadcasted_iota(jnp.int32, xf.shape, 1)
        xf = jnp.where(col < true_L, xf, 0.0)
    sum_ref[...] += jnp.sum(xf, axis=-1, keepdims=True)
    sq_ref[...] += jnp.sum(xf * xf, axis=-1, keepdims=True)


def _apply_kernel(x_ref, ss_ref, o_ref):
    """Fallback pass 2: y = x * scale + shift with (scale, shift) packed in one (row_tile, 2) block."""
    scale = ss_ref[:, 0:1]
    shift = ss_ref[:, 1:2]
    o_ref[...] = (x_ref[...].astype(jnp.float32) * scale + shift).astype(o_ref.dtype)


# ------------------------------ BN wrapper ----------------------------------
def batch_norm_train_pallas(x_nchw, w, b, eps=EPS, force_two_pass=False):
    """Training-mode batch norm with per-channel affine.

    Returns (y_nchw, batch_mean_c, batch_var_biased_c); the batch stats come from the
    kernel itself (single source of truth for the running-stat update).
    """
    N, C, H, W = x_nchw.shape
    L = H * W
    itemsize = x_nchw.dtype.itemsize

    vmem_cap = _vmem_capacity_bytes()
    budget = int(vmem_cap * 0.6)                        # working-set target
    vmem_limit = min(int(vmem_cap * 0.75), 112 << 20)   # 48 MiB on v7x, ~96 MiB on v5e/v6e

    wf = w.astype(jnp.float32)
    bf = b.astype(jnp.float32)

    # ---------------- fused fast path: one HBM read of x ---------------------
    ct = None if force_two_pass else _choose_fused_ct(N, C, L, budget, itemsize)
    if ct is not None:
        x3 = x_nchw.reshape(N, C, L)                    # free contiguous view of NCHW
        wb = jnp.stack([wf, bf], axis=1)                # (C, 2)
        grid_c = _cdiv(C, ct)
        y3, mv = pl.pallas_call(
            functools.partial(_fused_bn_kernel, inv_n=1.0 / (N * L), eps=eps),
            out_shape=(jax.ShapeDtypeStruct((N, C, L), x_nchw.dtype),
                       jax.ShapeDtypeStruct((C, 2), jnp.float32)),
            grid_spec=pltpu.PrefetchScalarGridSpec(
                num_scalar_prefetch=0,
                grid=(grid_c,),
                in_specs=[pl.BlockSpec((N, ct, L), lambda c: (0, c, 0)),
                          pl.BlockSpec((ct, 2), lambda c: (c, 0))],
                out_specs=[pl.BlockSpec((N, ct, L), lambda c: (0, c, 0)),
                           pl.BlockSpec((ct, 2), lambda c: (c, 0))]),
            compiler_params=pltpu.CompilerParams(
                dimension_semantics=("parallel",),
                vmem_limit_bytes=vmem_limit),
            cost_estimate=pl.CostEstimate(
                flops=int(8 * N * C * L), transcendentals=0,
                bytes_accessed=int(2 * N * C * L * itemsize + 16 * C)),
        )(x3, wb)
        return y3.reshape(N, C, H, W), mv[:, 0], mv[:, 1]

    # ---------------- two-pass fallback (slab too large for VMEM) ------------
    rows = N * C
    x2d = x_nchw.reshape(rows, L)                       # free contiguous view, no transpose
    row_tile, l_tile = _choose_two_pass_tiles(rows, L, budget, itemsize)
    grid = (_cdiv(rows, row_tile), _cdiv(L, l_tile))

    # pass 1: per-row sum / sumsq (reduction axis last, "arbitrary")
    sums, sqs = pl.pallas_call(
        functools.partial(_stats_kernel, true_L=L, l_tile=l_tile),
        out_shape=(jax.ShapeDtypeStruct((rows, 1), jnp.float32),
                   jax.ShapeDtypeStruct((rows, 1), jnp.float32)),
        grid_spec=pltpu.PrefetchScalarGridSpec(
            num_scalar_prefetch=0,
            grid=grid,
            in_specs=[pl.BlockSpec((row_tile, l_tile), lambda r, l: (r, l))],
            out_specs=[pl.BlockSpec((row_tile, 1), lambda r, l: (r, 0)),
                       pl.BlockSpec((row_tile, 1), lambda r, l: (r, 0))]),
        compiler_params=pltpu.CompilerParams(
            dimension_semantics=("parallel", "arbitrary"),
            vmem_limit_bytes=vmem_limit),
        cost_estimate=pl.CostEstimate(
            flops=int(3 * rows * L), transcendentals=0,
            bytes_accessed=int(rows * L * itemsize + 8 * rows)),
    )(x2d)

    # tiny cross-batch combine (N partial sums per channel) in plain JAX
    n_elems = N * L
    ch_sum = jnp.sum(sums.reshape(N, C), axis=0)
    ch_sq = jnp.sum(sqs.reshape(N, C), axis=0)
    mean = ch_sum / n_elems
    var = jnp.maximum(ch_sq / n_elems - mean * mean, 0.0)       # biased batch var
    inv_std = jax.lax.rsqrt(var + eps)
    scale_c = inv_std * wf
    shift_c = bf - mean * scale_c
    # packed per-row affine: (rows, 2) = [scale | shift]
    ss = jnp.stack([jnp.tile(scale_c, (N,)), jnp.tile(shift_c, (N,))], axis=1)

    # pass 2: y = x * scale + shift (lane-dense output, both axes parallel)
    y2d = pl.pallas_call(
        _apply_kernel,
        out_shape=jax.ShapeDtypeStruct((rows, L), x_nchw.dtype),
        grid_spec=pltpu.PrefetchScalarGridSpec(
            num_scalar_prefetch=0,
            grid=grid,
            in_specs=[pl.BlockSpec((row_tile, l_tile), lambda r, l: (r, l)),
                      pl.BlockSpec((row_tile, 2), lambda r, l: (r, 0))],
            out_specs=pl.BlockSpec((row_tile, l_tile), lambda r, l: (r, l))),
        compiler_params=pltpu.CompilerParams(
            dimension_semantics=("parallel", "parallel"),
            vmem_limit_bytes=vmem_limit),
        cost_estimate=pl.CostEstimate(
            flops=int(2 * rows * L), transcendentals=0,
            bytes_accessed=int(2 * rows * L * itemsize + 8 * rows)),
    )(x2d, ss)

    return y2d.reshape(N, C, H, W), mean, var


# ------------------------ HyperNetwork (param setup) ------------------------
def init_hypernet(key, in_dim, hidden_dim, out_dim):
    """Deterministic init of HyperNetwork(5, 10, 2*num_features): Linear->ReLU->Linear."""
    k1, k2, k3, k4 = jax.random.split(key, 4)
    s1 = 1.0 / jnp.sqrt(in_dim)
    s2 = 1.0 / jnp.sqrt(hidden_dim)
    return {
        "W1": jax.random.uniform(k1, (hidden_dim, in_dim), jnp.float32, -s1, s1),
        "b1": jax.random.uniform(k2, (hidden_dim,), jnp.float32, -s1, s1),
        "W2": jax.random.uniform(k3, (out_dim, hidden_dim), jnp.float32, -s2, s2),
        "b2": jax.random.uniform(k4, (out_dim,), jnp.float32, -s2, s2),
    }


def hypernet_get_task_weights(params, task_embedding):
    # Tiny 5->10->2C MLP: left in plain JAX (far below one MXU pass; no win from fusing).
    h = jnp.maximum(task_embedding @ params["W1"].T + params["b1"], 0.0)
    return h @ params["W2"].T + params["b2"]


# --------------------------- full module forward ----------------------------
def hyper_batch_norm2d_forward(x_nchw, task_embedding, hnet_params,
                               running_mean, running_var):
    C = x_nchw.shape[1]
    affine = hypernet_get_task_weights(hnet_params, task_embedding)
    w = affine[:C]
    b = affine[C:2 * C]

    y, batch_mean, batch_var = batch_norm_train_pallas(x_nchw, w, b)

    # Running-stat momentum update from the kernel's own stats (no second pass over x).
    n = x_nchw.shape[0] * x_nchw.shape[2] * x_nchw.shape[3]
    correction = n / max(n - 1, 1)
    new_rm = (1 - MOMENTUM) * running_mean + MOMENTUM * batch_mean
    new_rv = (1 - MOMENTUM) * running_var + MOMENTUM * (batch_var * correction)
    return y, new_rm, new_rv


# --------------------------------- main -------------------------------------
if __name__ == "__main__":
    num_features = 4
    key = jax.random.PRNGKey(0)
    kx, ke, kh, kx2 = jax.random.split(key, 4)

    task_embedding = jax.random.normal(ke, (5,), dtype=jnp.float32)
    hnet_params = init_hypernet(kh, in_dim=5, hidden_dim=10, out_dim=2 * num_features)
    running_mean = jnp.zeros((num_features,), jnp.float32)
    running_var = jnp.ones((num_features,), jnp.float32)

    # ---- test 1: fused single-HBM-pass path (small NCHW) -------------------
    N, C, H, W = 2, num_features, 16, 16
    x = jax.random.normal(kx, (N, C, H, W), dtype=jnp.float32)
    y, new_rm, new_rv = hyper_batch_norm2d_forward(
        x, task_embedding, hnet_params, running_mean, running_var)
    y = jax.block_until_ready(y)

    affine = hypernet_get_task_weights(hnet_params, task_embedding)
    w_ref = affine[:C].reshape(1, C, 1, 1)
    b_ref = affine[C:2 * C].reshape(1, C, 1, 1)
    mean_ref = jnp.mean(x, axis=(0, 2, 3), keepdims=True)
    var_ref = jnp.var(x, axis=(0, 2, 3), keepdims=True)
    y_ref = (x - mean_ref) * jax.lax.rsqrt(var_ref + EPS) * w_ref + b_ref
    n_el = N * H * W
    rm_ref = (1 - MOMENTUM) * running_mean + MOMENTUM * mean_ref.reshape(-1)
    rv_ref = (1 - MOMENTUM) * running_var + MOMENTUM * (var_ref.reshape(-1) * n_el / (n_el - 1))
    assert jnp.allclose(y, y_ref, atol=1e-4, rtol=1e-4), "fused: output mismatch"
    assert jnp.allclose(new_rm, rm_ref, atol=1e-5, rtol=1e-5), "fused: running_mean mismatch"
    assert jnp.allclose(new_rv, rv_ref, atol=1e-4, rtol=1e-4), "fused: running_var mismatch"

    # ---- test 2: two-pass fallback with ragged L tiling (masked tail) ------
    N2, H2, W2 = 2, 96, 96            # L = 9216 > 8192 -> l_tile = 8192 + masked tail
    x2 = jax.random.normal(kx2, (N2, C, H2, W2), dtype=jnp.float32)
    w2 = affine[:C]
    b2 = affine[C:2 * C]
    y2, m2, v2 = batch_norm_train_pallas(x2, w2, b2, force_two_pass=True)
    y2 = jax.block_until_ready(y2)

    mean2_ref = jnp.mean(x2, axis=(0, 2, 3))
    var2_ref = jnp.var(x2, axis=(0, 2, 3))
    y2_ref = ((x2 - mean2_ref.reshape(1, C, 1, 1))
              * jax.lax.rsqrt(var2_ref.reshape(1, C, 1, 1) + EPS)
              * w2.reshape(1, C, 1, 1) + b2.reshape(1, C, 1, 1))
    assert jnp.allclose(y2, y2_ref, atol=1e-4, rtol=1e-4), "fallback: output mismatch"
    assert jnp.allclose(m2, mean2_ref, atol=1e-4, rtol=1e-4), "fallback: mean mismatch"
    assert jnp.allclose(v2, var2_ref, atol=1e-4, rtol=1e-4), "fallback: var mismatch"

    print("KERNEL_OK")
</pallas_src>

<mosaic_0001>
module attributes {stable_mosaic.version = 11 : i64} {
  func.func @_fused_bn_kernel(%arg0: i32, %arg1: memref<2x4x256xf32, #tpu.memory_space<vmem>>, %arg2: memref<4x2xf32, #tpu.memory_space<vmem>>, %arg3: memref<2x4x256xf32, #tpu.memory_space<vmem>>, %arg4: memref<4x2xf32, #tpu.memory_space<vmem>>) attributes {dimension_semantics = [#tpu.dimension_semantics<parallel>], iteration_bounds = array<i64: 1>, scalar_prefetch = 0 : i64, scratch_operands = 0 : i64, tpu.core_type = #tpu.core_type<tc>, window_params = [{transform_indices = @transform_0, window_bounds = array<i64: 2, 4, 256>}, {transform_indices = @transform_1, window_bounds = array<i64: 4, 2>}, {transform_indices = @transform_2, window_bounds = array<i64: 2, 4, 256>}, {transform_indices = @transform_3, window_bounds = array<i64: 4, 2>}]} {
    %c0 = arith.constant 0 : index
    %c0_0 = arith.constant 0 : index
    %c0_1 = arith.constant 0 : index
    %0 = vector.load %arg1[%c0, %c0_0, %c0_1] : memref<2x4x256xf32, #tpu.memory_space<vmem>>, vector<2x4x256xf32>
    %cst = arith.constant dense<0.000000e+00> : vector<4x256xf32>
    %1 = vector.multi_reduction <add>, %0, %cst [0] : vector<2x4x256xf32> to vector<4x256xf32>
    %cst_2 = arith.constant dense<0.000000e+00> : vector<4xf32>
    %2 = vector.multi_reduction <add>, %1, %cst_2 [1] : vector<4x256xf32> to vector<4xf32>
    %3 = vector.shape_cast %2 : vector<4xf32> to vector<4x1xf32>
    %cst_3 = arith.constant 0.001953125 : f32
    %4 = vector.broadcast %cst_3 : f32 to vector<4x1xf32>
    %5 = arith.mulf %3, %4 : vector<4x1xf32>
    %6 = vector.shape_cast %5 : vector<4x1xf32> to vector<1x4x1xf32>
    %7 = vector.broadcast %6 : vector<1x4x1xf32> to vector<2x4x256xf32>
    %8 = arith.subf %0, %7 : vector<2x4x256xf32>
    %9 = arith.mulf %8, %8 : vector<2x4x256xf32>
    %cst_4 = arith.constant dense<0.000000e+00> : vector<4x256xf32>
    %10 = vector.multi_reduction <add>, %9, %cst_4 [0] : vector<2x4x256xf32> to vector<4x256xf32>
    %cst_5 = arith.constant dense<0.000000e+00> : vector<4xf32>
    %11 = vector.multi_reduction <add>, %10, %cst_5 [1] : vector<4x256xf32> to vector<4xf32>
    %12 = vector.shape_cast %11 : vector<4xf32> to vector<4x1xf32>
    %cst_6 = arith.constant 0.001953125 : f32
    %13 = vector.broadcast %cst_6 : f32 to vector<4x1xf32>
    %14 = arith.mulf %12, %13 : vector<4x1xf32>
    %cst_7 = arith.constant 9.99999974E-6 : f32
    %15 = vector.broadcast %cst_7 : f32 to vector<4x1xf32>
    %16 = arith.addf %14, %15 : vector<4x1xf32>
    %17 = math.rsqrt %16 : vector<4x1xf32>
    %c0_8 = arith.constant 0 : index
    %c0_9 = arith.constant 0 : index
    %18 = vector.load %arg2[%c0_8, %c0_9] : memref<4x2xf32, #tpu.memory_space<vmem>>, vector<4x1xf32>
    %c0_10 = arith.constant 0 : index
    %c1 = arith.constant 1 : index
    %19 = vector.load %arg2[%c0_10, %c1] : memref<4x2xf32, #tpu.memory_space<vmem>>, vector<4x1xf32>
    %20 = arith.mulf %17, %18 : vector<4x1xf32>
    %21 = vector.shape_cast %20 : vector<4x1xf32> to vector<1x4x1xf32>
    %22 = vector.broadcast %21 : vector<1x4x1xf32> to vector<2x4x256xf32>
    %23 = arith.mulf %8, %22 : vector<2x4x256xf32>
    %24 = vector.shape_cast %19 : vector<4x1xf32> to vector<1x4x1xf32>
    %25 = vector.broadcast %24 : vector<1x4x1xf32> to vector<2x4x256xf32>
    %26 = arith.addf %23, %25 : vector<2x4x256xf32>
    %c0_11 = arith.constant 0 : index
    %c0_12 = arith.constant 0 : index
    %c0_13 = arith.constant 0 : index
    %27 = vector.load %arg3[%c0_11, %c0_12, %c0_13] : memref<2x4x256xf32, #tpu.memory_space<vmem>>, vector<2x4x256xf32>
    tpu.vector_store %arg3[%c0_11, %c0_12, %c0_13], %26 {strides = array<i32>} : memref<2x4x256xf32, #tpu.memory_space<vmem>>, vector<2x4x256xf32>,
    %c0_14 = arith.constant 0 : index
    %c0_15 = arith.constant 0 : index
    %28 = vector.load %arg4[%c0_14, %c0_15] : memref<4x2xf32, #tpu.memory_space<vmem>>, vector<4x1xf32>
    tpu.vector_store %arg4[%c0_14, %c0_15], %5 {strides = array<i32>} : memref<4x2xf32, #tpu.memory_space<vmem>>, vector<4x1xf32>,
    %c0_16 = arith.constant 0 : index
    %c1_17 = arith.constant 1 : index
    %29 = vector.load %arg4[%c0_16, %c1_17] : memref<4x2xf32, #tpu.memory_space<vmem>>, vector<4x1xf32>
    tpu.vector_store %arg4[%c0_16, %c1_17], %14 {strides = array<i32>} : memref<4x2xf32, #tpu.memory_space<vmem>>, vector<4x1xf32>,
    return
  }
  func.func @transform_0(%arg0: i32) -> (i32, i32, i32) {
    %c0_i32 = arith.constant 0 : i32
    %c0_i32_0 = arith.constant 0 : i32
    %c0_i32_1 = arith.constant 0 : i32
    return %c0_i32, %arg0, %c0_i32_0 : i32, i32, i32
  }
  func.func @transform_1(%arg0: i32) -> (i32, i32) {
    %c0_i32 = arith.constant 0 : i32
    %c0_i32_0 = arith.constant 0 : i32
    return %arg0, %c0_i32 : i32, i32
  }
  func.func @transform_2(%arg0: i32) -> (i32, i32, i32) {
    %c0_i32 = arith.constant 0 : i32
    %c0_i32_0 = arith.constant 0 : i32
    %c0_i32_1 = arith.constant 0 : i32
    return %c0_i32, %arg0, %c0_i32_0 : i32, i32, i32
  }
  func.func @transform_3(%arg0: i32) -> (i32, i32) {
    %c0_i32 = arith.constant 0 : i32
    %c0_i32_0 = arith.constant 0 : i32
    return %arg0, %c0_i32 : i32, i32
  }
}

</mosaic_0001>

<llo_original>
// kernel: tpu_custom_call.1
$region0: #{tpu_custom_call.1}
  #allocation0 [shape = 'u32[]', space=smem, size = 0x4, offset = 0x4, fixed_abs, tag = 'smem constant byte address 0x4 - core index']
  #allocation1 [shape = 'u32[144,128]{1,0:T(1,128)}', space=vmem, size = 0x12000, scoped, tag = 'internal scratch']
  %s0 = inlined_call_operand.hbm [shape: f32[2,4,256], index: 0, kind: input, shape index: {}]
  %s1 = inlined_call_operand.vmem [shape: f32[4,2], index: 1, kind: input, shape index: {}]
  %s2 = inlined_call_operand.hbm [shape: f32[2,4,256], index: 2, kind: output, shape index: {0}]
  %s3 = inlined_call_operand.vmem [shape: f32[4,2], index: 3, kind: output, shape index: {1}]
  %4 = xla_tuple %s2, %s3
  %s5 = sld [smem:[#allocation0]]
  $region30: #{tpu_custom_call.1} parent=0
    _
  %s7 = ssub.s32 1, %s5
  %s8 = scalar_select 0, %s7, %s5
  $region1: #{tpu_custom_call.1} parent=0
    #allocation2 [shape = 'u8[8192]{0}', space=vmem, size = 0x2000, scoped, tag = 'input window, operand 0, single buffered']
    #allocation3 [shape = 's32[1]{0}', space=sflag, size = 0x4, scoped, tag = 'scoped memory for tpu_custom_call.1']
    #allocation4 [shape = 's32[1]{0}', space=sflag, size = 0x4, scoped, tag = 'scoped memory for tpu_custom_call.1']
    #allocation5 [shape = 'u8[8192]{0}', space=vmem, size = 0x2000, scoped, tag = 'output window, operand 0, single buffered']
    %9 = vsyncpa [#allocation3], 0
    %10 = vsyncpa [#allocation4], 0
    // Predicated region
    $region2: #{tpu_custom_call.1} parent=1 // pred_check
      _
    $region3: #{tpu_custom_call.1} parent=1 // pred_check_branch
      %12 = sbr.rel (0) target = $region5
    $region4: #{tpu_custom_call.1} parent=1 // pred_region
      %s14 = ssub.s32 256, 256
      %15 = vsyncadd [#allocation3], %s14
      %s16 = sshll.u32 [#allocation2], 4
      %s17 = int_to_ptr.vmem [resolvable:$true] %s16
      %22 = dma.hbm_to_vmem [thread:$0]  %s0, 256, %s17, [#allocation3], 128, 128, 8
    $region5: #{tpu_custom_call.1} parent=1 // pred_fallthru
      _
    // Predicated region
    $region6: #{tpu_custom_call.1} parent=1 // pred_check
      _
    $region7: #{tpu_custom_call.1} parent=1 // pred_check_branch
      %24 = sbr.rel (0) target = $region9
    $region8: #{tpu_custom_call.1} parent=1 // pred_region
      _
    $region9: #{tpu_custom_call.1} parent=1 // pred_fallthru
      _
    // Predicated region
    $region10: #{tpu_custom_call.1} parent=1 // pred_check
      _
    $region11: #{tpu_custom_call.1} parent=1 // pred_check_branch
      %26 = sbr.rel (0) target = $region13
    $region12: #{tpu_custom_call.1} parent=1 // pred_region
      %27 = dma.done [#allocation3], 256
    $region13: #{tpu_custom_call.1} parent=1 // pred_fallthru
      _
    %v28 = vld [vmem:[#allocation2] sm:$0xff]
    %v29 = vld [vmem:[#allocation2 + $0x8] sm:$0xff]
    %v32 = vcombine.high %v28, %v28
    %v33 = vcombine.high %v29, %v29
    %vm36 = vcmask 1043456
    %v37 = vsel %vm36, %v28, 0.0
    %v38 = vsel %vm36, %v29, 0.0
    %v39 = vadd.f32 %v37, %v38
    %v40 = vsel %vm36, %v32, 0.0
    %v41 = vsel %vm36, %v33, 0.0
    %v42 = vadd.f32 %v40, %v41
    %v43 = vsel %vm36, %v39, 0.0
    %v44 = vsel %vm36, %v42, 0.0
    %v45 = vadd.f32 %v43, %v44
    %46 = vadd.xlane.f32.xlu0 %v45
    %v47 = vpop.xlane.xlu0 %46
    %v48 = vmul.f32 %v47, 0.001953125
    %v51 = vunpack.c.l.s4 839922192
    %v52 = vunpack.c.0.s8 %v51
    %v53 = vlaneseq
    %v54 = vshrl.u32 %v53, 7
    %v55 = vsub.s32 %v52, %v54
    %v56 = vrot.slane %v48, %v55
    %v58 = vsub.f32 %v28, %v56
    %v59 = vsub.f32 %v29, %v56
    %v60 = vmul.f32 %v58, %v58
    %v61 = vmul.f32 %v59, %v59
    %v64 = vcombine.high %v60, %v60
    %v65 = vcombine.high %v61, %v61
    %v68 = vsel %vm36, %v60, 0.0
    %v69 = vsel %vm36, %v61, 0.0
    %v70 = vadd.f32 %v68, %v69
    %v71 = vsel %vm36, %v64, 0.0
    %v72 = vsel %vm36, %v65, 0.0
    %v73 = vadd.f32 %v71, %v72
    %v74 = vsel %vm36, %v70, 0.0
    %v75 = vsel %vm36, %v73, 0.0
    %v76 = vadd.f32 %v74, %v75
    %77 = vadd.xlane.f32.xlu0 %v76
    %v78 = vpop.xlane.xlu0 %77
    %v79 = vmul.f32 %v78, 0.001953125
    %v80 = vadd.f32 %v79, 1e-05
    %v81 = vrsqrt.pop %v80
    %v82 = vld [vmem:[%s1] sm:$0xf]
    %v83 = vmul.f32 %v81, %v82
    %85 = vset.pattern.permute.xlu0 0
    %86 = vperm.xlu0 %85, %v83
    %v87 = vpop.permute.xlu0 %86
    %v89 = vunpack.c.l.s4 839922192
    %v90 = vunpack.c.0.s8 %v89
    %v91 = vlaneseq
    %v92 = vshrl.u32 %v91, 7
    %v93 = vsub.s32 %v90, %v92
    %v94 = vrot.slane %v87, %v93
    %v96 = vmul.f32 %v58, %v94
    %v97 = vmul.f32 %v59, %v94
    %99 = vset.pattern.permute.xlu0 1
    %100 = vperm.xlu0 %99, %v82
    %v101 = vpop.permute.xlu0 %100
    %v103 = vunpack.c.l.s4 839922192
    %v104 = vunpack.c.0.s8 %v103
    %v105 = vlaneseq
    %v106 = vshrl.u32 %v105, 7
    %v107 = vsub.s32 %v104, %v106
    %v108 = vrot.slane %v101, %v107
    %v110 = vadd.f32 %v96, %v108
    %v111 = vadd.f32 %v97, %v108
    %112 = vst [vmem:[#allocation5] sm:$0xff] %v110
    %113 = vst [vmem:[#allocation5 + $0x8] sm:$0xff] %v111
    %vm114 = vcmask 3072
    %115 = vst.msk [vmem:[%s3] sm:$0xf] %vm114, %v48
    %vm116 = vcmask 11272
    %117 = vst.msk [vmem:[%s3] sm:$0xf] %vm116, %v79
    // Predicated region
    $region14: #{tpu_custom_call.1} parent=1 // pred_check
      _
    $region15: #{tpu_custom_call.1} parent=1 // pred_check_branch
      %119 = sbr.rel (0) target = $region17
    $region16: #{tpu_custom_call.1} parent=1 // pred_region
      %s121 = ssub.s32 256, 256
      %122 = vsyncadd [#allocation4], %s121
      %s123 = sshll.u32 [#allocation5], 4
      %s124 = int_to_ptr.vmem [resolvable:$true] %s123
      %129 = dma.vmem_to_hbm [thread:$0]  %s124, 256, %s2, [#allocation4], 128, 128, 8
    $region17: #{tpu_custom_call.1} parent=1 // pred_fallthru
      _
    // Predicated region
    $region18: #{tpu_custom_call.1} parent=1 // pred_check
      _
    $region19: #{tpu_custom_call.1} parent=1 // pred_check_branch
      %131 = sbr.rel (0) target = $region21
    $region20: #{tpu_custom_call.1} parent=1 // pred_region
      _
    $region21: #{tpu_custom_call.1} parent=1 // pred_fallthru
      _
    // Predicated region
    $region22: #{tpu_custom_call.1} parent=1 // pred_check
      _
    $region23: #{tpu_custom_call.1} parent=1 // pred_check_branch
      %133 = sbr.rel (0) target = $region25
    $region24: #{tpu_custom_call.1} parent=1 // pred_region
      %134 = dma.done [#allocation4], 256
    $region25: #{tpu_custom_call.1} parent=1 // pred_fallthru
      _
    // Predicated region
    $region26: #{tpu_custom_call.1} parent=1 // pred_check
      _
    $region27: #{tpu_custom_call.1} parent=1 // pred_check_branch
      %136 = sbr.rel (0) target = $region29
    $region28: #{tpu_custom_call.1} parent=1 // pred_region
      _
    $region29: #{tpu_custom_call.1} parent=1 // pred_fallthru
      _
    %137 = vsyncpa [#allocation3], 1
    %138 = vsyncpa [#allocation4], 1

</llo_original>
